<compile_context>
chip_gen: v5e
topology: v5e:2x2
jax: 0.10.0
libtpu: 0.0.40
codegen_flags: <defaults>
</compile_context>

<pallas_src>
import jax
import jax.numpy as jnp
from jax.experimental import pallas as pl
from jax.experimental.pallas import tpu as pltpu

_LANE = 128


def _make_mlp_critic_kernel(n_layers):
    """Build a fused MLP kernel for `n_layers` Linear layers.

    Ref layout per invocation:
      refs[0]            : x_ref   [obs_dim, TB]   (batch on the 128-lane axis)
      refs[1 + 2l]       : w_l     [out_l, in_l]
      refs[2 + 2l]       : b_l     [out_l, 1]
      refs[-1]           : out_ref [1, TB]
    """

    def kernel(*refs):
        x_ref = refs[0]
        out_ref = refs[-1]
        p_refs = refs[1:-1]

        h = x_ref[...]
        for l in range(n_layers):
            w = p_refs[2 * l][...]
            b = p_refs[2 * l + 1][...]
            h = jnp.dot(w, h, preferred_element_type=jnp.float32) + b
            if l < n_layers - 1:          # tanh on hidden layers only
                h = jnp.tanh(h)
        out_ref[...] = h.astype(out_ref.dtype)

    return kernel


def _round_up(x, m):
    return ((x + m - 1) // m) * m


def mlp_critic_forward(obs, params, *, batch_tile=1024):
    """obs: [B, obs_dim] float32 -> value: [B] float32 (squeeze(-1) semantics)."""
    B, obs_dim = obs.shape
    n_layers = len(params) // 2
    assert len(params) == 2 * n_layers and params[-2].shape[0] == 1

    # Lane-dense batch tile: multiple of 128; biggest tile that still fits the
    # batch.  1024-wide f32 tiles keep obs/out blocks tiny (<<1 MiB) while
    # amortizing the ~0.35 us per-grid-step overhead.
    tb = min(_round_up(batch_tile, _LANE), _round_up(B, _LANE))
    b_pad = _round_up(B, tb)
    num_tiles = b_pad // tb

    # Zero-pad ragged batch and flip to feature-major so batch rides the
    # 128-lane axis inside the kernel.
    obs_t = jnp.pad(obs, ((0, b_pad - B), (0, 0))).T          # [obs_dim, b_pad]

    # Weights/biases: full-array blocks with constant index_maps -> Pallas
    # fetches them once and keeps them VMEM-resident across the batch grid;
    # only obs/out tiles are re-DMA'd and pipelined.
    def resident(arr):
        return pl.BlockSpec(arr.shape, lambda i: (0, 0))

    param_specs = [resident(p) for p in params]

    # Advisory cost hint for the XLA scheduler.
    flops = 0
    transcendentals = 0
    for l in range(n_layers):
        d_out, d_in = params[2 * l].shape
        flops += 2 * d_in * d_out * b_pad + d_out * b_pad
        if l < n_layers - 1:
            transcendentals += d_out * b_pad
    bytes_accessed = (obs_t.size + sum(p.size for p in params) + b_pad) * 4

    out = pl.pallas_call(
        _make_mlp_critic_kernel(n_layers),
        out_shape=jax.ShapeDtypeStruct((1, b_pad), jnp.float32),
        grid=(num_tiles,),
        in_specs=[pl.BlockSpec((obs_dim, tb), lambda i: (0, i))] + param_specs,
        out_specs=pl.BlockSpec((1, tb), lambda i: (0, i)),     # lane-dense store
        compiler_params=pltpu.CompilerParams(
            dimension_semantics=("parallel",)),                # megacore on v7x
        cost_estimate=pl.CostEstimate(
            flops=flops,
            transcendentals=transcendentals,
            bytes_accessed=bytes_accessed),
    )(obs_t, *params)

    # [1, b_pad] -> squeeze(-1) semantics + drop batch padding -> [B].
    return out[0, :B]


def init_params(key, obs_dim, hidden_sizes):
    """Linear params, torch-style [out, in] weights; biases stored [out, 1]."""
    sizes = [obs_dim] + list(hidden_sizes) + [1]
    params = []
    keys = jax.random.split(key, len(sizes) - 1)
    for k, (d_in, d_out) in zip(keys, zip(sizes[:-1], sizes[1:])):
        kw, kb = jax.random.split(k)
        bound = 1.0 / jnp.sqrt(d_in)   # torch.nn.Linear default init range
        w = jax.random.uniform(kw, (d_out, d_in), jnp.float32, -bound, bound)
        b = jax.random.uniform(kb, (d_out, 1), jnp.float32, -bound, bound)
        params.extend([w, b])
    return tuple(params)


if __name__ == "__main__":
    obs_dim = 16
    hidden_sizes = (32, 32)   # activation = Tanh between hidden layers
    batch = 8

    key = jax.random.PRNGKey(0)
    k_obs, k_params = jax.random.split(key)
    obs = jax.random.normal(k_obs, (batch, obs_dim), jnp.float32)
    params = init_params(k_params, obs_dim, hidden_sizes)

    fwd = jax.jit(mlp_critic_forward)
    v = fwd(obs, params)
    jax.block_until_ready(v)

    assert v.shape == (batch,), v.shape

    # Plain-JAX reference check of the fused kernel (batch-major math).
    w0, b0, w1, b1, w2, b2 = params
    ref = jnp.tanh(obs @ w0.T + b0[:, 0])
    ref = jnp.tanh(ref @ w1.T + b1[:, 0])
    ref = (ref @ w2.T + b2[:, 0])[:, 0]
    assert jnp.allclose(v, ref, atol=1e-5, rtol=1e-5), float(
        jnp.max(jnp.abs(v - ref)))

    print("KERNEL_OK")
</pallas_src>

<mosaic_0001>
module attributes {stable_mosaic.version = 11 : i64} {
  func.func @kernel(%arg0: i32, %arg1: memref<16x128xf32, #tpu.memory_space<vmem>>, %arg2: memref<32x16xf32, #tpu.memory_space<vmem>>, %arg3: memref<32x1xf32, #tpu.memory_space<vmem>>, %arg4: memref<32x32xf32, #tpu.memory_space<vmem>>, %arg5: memref<32x1xf32, #tpu.memory_space<vmem>>, %arg6: memref<1x32xf32, #tpu.memory_space<vmem>>, %arg7: memref<1x1xf32, #tpu.memory_space<vmem>>, %arg8: memref<1x128xf32, #tpu.memory_space<vmem>>) attributes {dimension_semantics = [#tpu.dimension_semantics<parallel>], iteration_bounds = array<i64: 1>, scalar_prefetch = 0 : i64, scratch_operands = 0 : i64, tpu.core_type = #tpu.core_type<tc>, window_params = [{transform_indices = @transform_0, window_bounds = array<i64: 16, 128>}, {pipeline_mode = #tpu.pipeline_mode<synchronous>, transform_indices = @transform_1, window_bounds = array<i64: 32, 16>}, {pipeline_mode = #tpu.pipeline_mode<synchronous>, transform_indices = @transform_2, window_bounds = array<i64: 32, 1>}, {pipeline_mode = #tpu.pipeline_mode<synchronous>, transform_indices = @transform_3, window_bounds = array<i64: 32, 32>}, {pipeline_mode = #tpu.pipeline_mode<synchronous>, transform_indices = @transform_4, window_bounds = array<i64: 32, 1>}, {pipeline_mode = #tpu.pipeline_mode<synchronous>, transform_indices = @transform_5, window_bounds = array<i64: 1, 32>}, {pipeline_mode = #tpu.pipeline_mode<synchronous>, transform_indices = @transform_6, window_bounds = array<i64: 1, 1>}, {transform_indices = @transform_7, window_bounds = array<i64: 1, 128>}]} {
    %c0 = arith.constant 0 : index
    %c0_0 = arith.constant 0 : index
    %0 = vector.load %arg1[%c0, %c0_0] : memref<16x128xf32, #tpu.memory_space<vmem>>, vector<16x128xf32>
    %c0_1 = arith.constant 0 : index
    %c0_2 = arith.constant 0 : index
    %1 = vector.load %arg2[%c0_1, %c0_2] : memref<32x16xf32, #tpu.memory_space<vmem>>, vector<32x16xf32>
    %c0_3 = arith.constant 0 : index
    %c0_4 = arith.constant 0 : index
    %2 = vector.load %arg3[%c0_3, %c0_4] : memref<32x1xf32, #tpu.memory_space<vmem>>, vector<32x1xf32>
    %cst = arith.constant dense<0.000000e+00> : vector<32x128xf32>
    %3 = tpu.matmul %1, %0, %cst {dimension_numbers = #tpu.dot_dimension_numbers<[1], [0], [0], [1], [0, 0, 1, 1], [], []>} : vector<32x16xf32>, vector<16x128xf32>, vector<32x128xf32> -> vector<32x128xf32>
    %4 = vector.broadcast %2 : vector<32x1xf32> to vector<32x128xf32>
    %5 = arith.addf %3, %4 : vector<32x128xf32>
    %6 = math.tanh %5 : vector<32x128xf32>
    %c0_5 = arith.constant 0 : index
    %c0_6 = arith.constant 0 : index
    %7 = vector.load %arg4[%c0_5, %c0_6] : memref<32x32xf32, #tpu.memory_space<vmem>>, vector<32x32xf32>
    %c0_7 = arith.constant 0 : index
    %c0_8 = arith.constant 0 : index
    %8 = vector.load %arg5[%c0_7, %c0_8] : memref<32x1xf32, #tpu.memory_space<vmem>>, vector<32x1xf32>
    %cst_9 = arith.constant dense<0.000000e+00> : vector<32x128xf32>
    %9 = tpu.matmul %7, %6, %cst_9 {dimension_numbers = #tpu.dot_dimension_numbers<[1], [0], [0], [1], [0, 0, 1, 1], [], []>} : vector<32x32xf32>, vector<32x128xf32>, vector<32x128xf32> -> vector<32x128xf32>
    %10 = vector.broadcast %8 : vector<32x1xf32> to vector<32x128xf32>
    %11 = arith.addf %9, %10 : vector<32x128xf32>
    %12 = math.tanh %11 : vector<32x128xf32>
    %c0_10 = arith.constant 0 : index
    %c0_11 = arith.constant 0 : index
    %13 = vector.load %arg6[%c0_10, %c0_11] : memref<1x32xf32, #tpu.memory_space<vmem>>, vector<1x32xf32>
    %c0_12 = arith.constant 0 : index
    %c0_13 = arith.constant 0 : index
    %14 = vector.load %arg7[%c0_12, %c0_13] : memref<1x1xf32, #tpu.memory_space<vmem>>, vector<1x1xf32>
    %cst_14 = arith.constant dense<0.000000e+00> : vector<1x128xf32>
    %15 = tpu.matmul %13, %12, %cst_14 {dimension_numbers = #tpu.dot_dimension_numbers<[1], [0], [0], [1], [0, 0, 1, 1], [], []>} : vector<1x32xf32>, vector<32x128xf32>, vector<1x128xf32> -> vector<1x128xf32>
    %16 = vector.broadcast %14 : vector<1x1xf32> to vector<1x128xf32>
    %17 = arith.addf %15, %16 : vector<1x128xf32>
    %c0_15 = arith.constant 0 : index
    %c0_16 = arith.constant 0 : index
    %18 = vector.load %arg8[%c0_15, %c0_16] : memref<1x128xf32, #tpu.memory_space<vmem>>, vector<1x128xf32>
    tpu.vector_store %arg8[%c0_15, %c0_16], %17 {strides = array<i32>} : memref<1x128xf32, #tpu.memory_space<vmem>>, vector<1x128xf32>,
    return
  }
  func.func @transform_0(%arg0: i32) -> (i32, i32) {
    %c0_i32 = arith.constant 0 : i32
    %c0_i32_0 = arith.constant 0 : i32
    return %c0_i32, %arg0 : i32, i32
  }
  func.func @transform_1(%arg0: i32) -> (i32, i32) {
    %c0_i32 = arith.constant 0 : i32
    %c0_i32_0 = arith.constant 0 : i32
    %c0_i32_1 = arith.constant 0 : i32
    return %c0_i32, %c0_i32_0 : i32, i32
  }
  func.func @transform_2(%arg0: i32) -> (i32, i32) {
    %c0_i32 = arith.constant 0 : i32
    %c0_i32_0 = arith.constant 0 : i32
    %c0_i32_1 = arith.constant 0 : i32
    return %c0_i32, %c0_i32_0 : i32, i32
  }
  func.func @transform_3(%arg0: i32) -> (i32, i32) {
    %c0_i32 = arith.constant 0 : i32
    %c0_i32_0 = arith.constant 0 : i32
    %c0_i32_1 = arith.constant 0 : i32
    return %c0_i32, %c0_i32_0 : i32, i32
  }
  func.func @transform_4(%arg0: i32) -> (i32, i32) {
    %c0_i32 = arith.constant 0 : i32
    %c0_i32_0 = arith.constant 0 : i32
    %c0_i32_1 = arith.constant 0 : i32
    return %c0_i32, %c0_i32_0 : i32, i32
  }
  func.func @transform_5(%arg0: i32) -> (i32, i32) {
    %c0_i32 = arith.constant 0 : i32
    %c0_i32_0 = arith.constant 0 : i32
    %c0_i32_1 = arith.constant 0 : i32
    return %c0_i32, %c0_i32_0 : i32, i32
  }
  func.func @transform_6(%arg0: i32) -> (i32, i32) {
    %c0_i32 = arith.constant 0 : i32
    %c0_i32_0 = arith.constant 0 : i32
    %c0_i32_1 = arith.constant 0 : i32
    return %c0_i32, %c0_i32_0 : i32, i32
  }
  func.func @transform_7(%arg0: i32) -> (i32, i32) {
    %c0_i32 = arith.constant 0 : i32
    %c0_i32_0 = arith.constant 0 : i32
    return %c0_i32, %arg0 : i32, i32
  }
}

</mosaic_0001>

<llo_original>
// kernel: mlp_critic_forward.1
$region0: #{mlp_critic_forward.1}
  #allocation0 [shape = 'u32[]', space=smem, size = 0x4, offset = 0x4, fixed_abs, tag = 'smem constant byte address 0x4 - core index']
  #allocation1 [shape = 'u32[72,128]{1,0:T(1,128)}', space=vmem, size = 0x9000, scoped, tag = 'internal scratch']
  #allocation2 [shape = 'f32[1,1]{1,0:T(1,128)S(1)}', space=vmem, size = 0x200, scoped, tag = 'scoped memory for mlp_critic_forward.1']
  %s0 = inlined_call_operand.vmem [shape: f32[16,128], index: 0, kind: input, shape index: {}]
  %s1 = inlined_call_operand.vmem [shape: f32[32,16], index: 1, kind: input, shape index: {}]
  %s2 = inlined_call_operand.vmem [shape: f32[32,1], index: 2, kind: input, shape index: {}]
  %s3 = inlined_call_operand.vmem [shape: f32[32,32], index: 3, kind: input, shape index: {}]
  %s4 = inlined_call_operand.vmem [shape: f32[32,1], index: 4, kind: input, shape index: {}]
  %s5 = inlined_call_operand.vmem [shape: f32[1,32], index: 5, kind: input, shape index: {}]
  %s6 = inlined_call_operand.<no memory space> [shape: f32[1,1], index: 6, kind: input, shape index: {}]
  %s7 = inlined_call_operand.vmem [shape: f32[1,128], index: 7, kind: output, shape index: {}]
  %s8 = sld [smem:[#allocation0]]
  $region38: #{mlp_critic_forward.1} parent=0
    _
  %s10 = ssub.s32 1, %s8
  %s11 = scalar_select 0, %s10, %s8
  %v12 = vstv %s6
  %13 = vst [vmem:[#allocation2] sm:$0x1] %v12
  // Predicated region
  $region2: #{mlp_critic_forward.1} parent=0 // pred_check
    _
  $region3: #{mlp_critic_forward.1} parent=0 // pred_check_branch
    %15 = sbr.rel (0) target = $region5
  $region4: #{mlp_critic_forward.1} parent=0 // pred_region
    _
  $region5: #{mlp_critic_forward.1} parent=0 // pred_fallthru
    _
  // Predicated region
  $region6: #{mlp_critic_forward.1} parent=0 // pred_check
    _
  $region7: #{mlp_critic_forward.1} parent=0 // pred_check_branch
    %17 = sbr.rel (0) target = $region9
  $region8: #{mlp_critic_forward.1} parent=0 // pred_region
    _
  $region9: #{mlp_critic_forward.1} parent=0 // pred_fallthru
    _
  // Predicated region
  $region10: #{mlp_critic_forward.1} parent=0 // pred_check
    _
  $region11: #{mlp_critic_forward.1} parent=0 // pred_check_branch
    %19 = sbr.rel (0) target = $region13
  $region12: #{mlp_critic_forward.1} parent=0 // pred_region
    _
  $region13: #{mlp_critic_forward.1} parent=0 // pred_fallthru
    _
  // Predicated region
  $region14: #{mlp_critic_forward.1} parent=0 // pred_check
    _
  $region15: #{mlp_critic_forward.1} parent=0 // pred_check_branch
    %21 = sbr.rel (0) target = $region17
  $region16: #{mlp_critic_forward.1} parent=0 // pred_region
    _
  $region17: #{mlp_critic_forward.1} parent=0 // pred_fallthru
    _
  // Predicated region
  $region18: #{mlp_critic_forward.1} parent=0 // pred_check
    _
  $region19: #{mlp_critic_forward.1} parent=0 // pred_check_branch
    %23 = sbr.rel (0) target = $region21
  $region20: #{mlp_critic_forward.1} parent=0 // pred_region
    _
  $region21: #{mlp_critic_forward.1} parent=0 // pred_fallthru
    _
  // Predicated region
  $region22: #{mlp_critic_forward.1} parent=0 // pred_check
    _
  $region23: #{mlp_critic_forward.1} parent=0 // pred_check_branch
    %25 = sbr.rel (0) target = $region25
  $region24: #{mlp_critic_forward.1} parent=0 // pred_region
    _
  $region25: #{mlp_critic_forward.1} parent=0 // pred_fallthru
    _
  // Predicated region
  $region26: #{mlp_critic_forward.1} parent=0 // pred_check
    _
  $region27: #{mlp_critic_forward.1} parent=0 // pred_check_branch
    %27 = sbr.rel (0) target = $region29
  $region28: #{mlp_critic_forward.1} parent=0 // pred_region
    _
  $region29: #{mlp_critic_forward.1} parent=0 // pred_fallthru
    _
  %v28 = vld [vmem:[%s0] sm:$0xff]
  %v29 = vld [vmem:[%s0 + $0x8] sm:$0xff]
  %v30 = vld [vmem:[%s1] sm:$0xff]
  %v31 = vld [vmem:[%s1 + $0x8] sm:$0xff]
  %v32 = vld [vmem:[%s1 + $0x10] sm:$0xff]
  %v33 = vld [vmem:[%s1 + $0x18] sm:$0xff]
  %v34 = vld [vmem:[%s2] sm:$0xff]
  %v35 = vld [vmem:[%s2 + $0x8] sm:$0xff]
  %v36 = vld [vmem:[%s2 + $0x10] sm:$0xff]
  %v37 = vld [vmem:[%s2 + $0x18] sm:$0xff]
  %39 = vset.pattern.permute.xlu0 0
  %40 = vperm.xlu0 %39, %v34
  %v41 = vpop.permute.xlu0 %40
  %44 = vset.pattern.permute.xlu0 0
  %45 = vperm.xlu0 %44, %v35
  %v46 = vpop.permute.xlu0 %45
  %49 = vset.pattern.permute.xlu0 0
  %50 = vperm.xlu0 %49, %v36
  %v51 = vpop.permute.xlu0 %50
  %54 = vset.pattern.permute.xlu0 0
  %55 = vperm.xlu0 %54, %v37
  %v56 = vpop.permute.xlu0 %55
  %vm58 = vcmask 130048
  %v60 = vsel %vm58, %v30, 0
  %v63 = vsel %vm58, %v31, 0
  %v66 = vsel %vm58, %v32, 0
  %v69 = vsel %vm58, %v33, 0
  %71 = vmatpush.msra.mxu0 0.0
  %72 = vmatpush.msra.mxu0 0.0
  %73 = vmatpush.msra.mxu0 0.0
  %74 = vmatpush.msra.mxu0 0.0
  %75 = vmatpush.msra.mxu0 0.0
  %76 = vmatpush.msra.mxu0 0.0
  %77 = vmatpush.msra.mxu0 0.0
  %78 = vmatpush.msra.mxu0 0.0
  %79 = vmatpush.msra.mxu0 0.0
  %80 = vmatpush.msra.mxu0 0.0
  %81 = vmatpush.msra.mxu0 0.0
  %82 = vmatpush.msra.mxu0 0.0
  %83 = vmatpush.msra.mxu0 0.0
  %84 = vmatpush.msra.mxu0 0.0
  %85 = vmatpush.msra.mxu0 %v29
  %86 = vmatpush.msra.mxu0 %v28
  %87 = vmatmul.f32.gmra.mxu0 %v60
  %v88 = vpop.f32.mrf.mxu0
  %v89 = vadd.f32 %v41, %v88
  %90 = vmatmul.f32.gmra.mxu0 %v63
  %v91 = vpop.f32.mrf.mxu0
  %v92 = vadd.f32 %v46, %v91
  %93 = vmatmul.f32.gmra.mxu0 %v66
  %v94 = vpop.f32.mrf.mxu0
  %v95 = vadd.f32 %v51, %v94
  %96 = vmatmul.f32.gmra.mxu0 %v69
  %v97 = vpop.f32.mrf.mxu0
  %v98 = vadd.f32 %v56, %v97
  %99 = vdwg.mxu0
  %v100 = vtanh.pop %v89
  %v101 = vtanh.pop %v92
  %v102 = vtanh.pop %v95
  %v103 = vtanh.pop %v98
  %v104 = vld [vmem:[%s3] sm:$0xff]
  %v105 = vld [vmem:[%s3 + $0x8] sm:$0xff]
  %v106 = vld [vmem:[%s3 + $0x10] sm:$0xff]
  %v107 = vld [vmem:[%s3 + $0x18] sm:$0xff]
  %v108 = vld [vmem:[%s4] sm:$0xff]
  %v109 = vld [vmem:[%s4 + $0x8] sm:$0xff]
  %v110 = vld [vmem:[%s4 + $0x10] sm:$0xff]
  %v111 = vld [vmem:[%s4 + $0x18] sm:$0xff]
  %113 = vset.pattern.permute.xlu0 0
  %114 = vperm.xlu0 %113, %v108
  %v115 = vpop.permute.xlu0 %114
  %118 = vset.pattern.permute.xlu0 0
  %119 = vperm.xlu0 %118, %v109
  %v120 = vpop.permute.xlu0 %119
  %123 = vset.pattern.permute.xlu0 0
  %124 = vperm.xlu0 %123, %v110
  %v125 = vpop.permute.xlu0 %124
  %128 = vset.pattern.permute.xlu0 0
  %129 = vperm.xlu0 %128, %v111
  %v130 = vpop.permute.xlu0 %129
  %vm132 = vcmask 261120
  %v134 = vsel %vm132, %v104, 0
  %v137 = vsel %vm132, %v105, 0
  %v140 = vsel %vm132, %v106, 0
  %v143 = vsel %vm132, %v107, 0
  %145 = vmatpush.msra.mxu0 0.0
  %146 = vmatpush.msra.mxu0 0.0
  %147 = vmatpush.msra.mxu0 0.0
  %148 = vmatpush.msra.mxu0 0.0
  %149 = vmatpush.msra.mxu0 0.0
  %150 = vmatpush.msra.mxu0 0.0
  %151 = vmatpush.msra.mxu0 0.0
  %152 = vmatpush.msra.mxu0 0.0
  %153 = vmatpush.msra.mxu0 0.0
  %154 = vmatpush.msra.mxu0 0.0
  %155 = vmatpush.msra.mxu0 0.0
  %156 = vmatpush.msra.mxu0 0.0
  %157 = vmatpush.msra.mxu0 %v103
  %158 = vmatpush.msra.mxu0 %v102
  %159 = vmatpush.msra.mxu0 %v101
  %160 = vmatpush.msra.mxu0 %v100
  %161 = vmatmul.f32.gmra.mxu0 %v134
  %v162 = vpop.f32.mrf.mxu0
  %v163 = vadd.f32 %v115, %v162
  %164 = vmatmul.f32.gmra.mxu0 %v137
  %v165 = vpop.f32.mrf.mxu0
  %v166 = vadd.f32 %v120, %v165
  %167 = vmatmul.f32.gmra.mxu0 %v140
  %v168 = vpop.f32.mrf.mxu0
  %v169 = vadd.f32 %v125, %v168
  %170 = vmatmul.f32.gmra.mxu0 %v143
  %v171 = vpop.f32.mrf.mxu0
  %v172 = vadd.f32 %v130, %v171
  %173 = vdwg.mxu0
  %v174 = vtanh.pop %v163
  %v175 = vtanh.pop %v166
  %v176 = vtanh.pop %v169
  %v177 = vtanh.pop %v172
  %v178 = vld [vmem:[%s5] sm:$0x1]
  %v179 = vld [vmem:[#allocation2] sm:$0x1]
  %181 = vset.pattern.permute.xlu0 0
  %182 = vperm.xlu0 %181, %v179
  %v183 = vpop.permute.xlu0 %182
  %v185 = vperm.slane %v183, 0
  %v187 = vsel %vm132, %v178, 0
  %189 = vmatpush.msra.mxu0 0.0
  %190 = vmatpush.msra.mxu0 0.0
  %191 = vmatpush.msra.mxu0 0.0
  %192 = vmatpush.msra.mxu0 0.0
  %193 = vmatpush.msra.mxu0 0.0
  %194 = vmatpush.msra.mxu0 0.0
  %195 = vmatpush.msra.mxu0 0.0
  %196 = vmatpush.msra.mxu0 0.0
  %197 = vmatpush.msra.mxu0 0.0
  %198 = vmatpush.msra.mxu0 0.0
  %199 = vmatpush.msra.mxu0 0.0
  %200 = vmatpush.msra.mxu0 0.0
  %201 = vmatpush.msra.mxu0 %v177
  %202 = vmatpush.msra.mxu0 %v176
  %203 = vmatpush.msra.mxu0 %v175
  %204 = vmatpush.msra.mxu0 %v174
  %205 = vmatmul.f32.gmra.mxu0 %v187
  %v206 = vpop.f32.mrf.mxu0
  %v207 = vadd.f32 %v185, %v206
  %208 = vdwg.mxu0
  %209 = vst [vmem:[%s7] sm:$0x1] %v207
  // Predicated region
  $region30: #{mlp_critic_forward.1} parent=0 // pred_check
    _
  $region31: #{mlp_critic_forward.1} parent=0 // pred_check_branch
    %211 = sbr.rel (0) target = $region33
  $region32: #{mlp_critic_forward.1} parent=0 // pred_region
    _
  $region33: #{mlp_critic_forward.1} parent=0 // pred_fallthru
    _
  // Predicated region
  $region34: #{mlp_critic_forward.1} parent=0 // pred_check
    _
  $region35: #{mlp_critic_forward.1} parent=0 // pred_check_branch
    %213 = sbr.rel (0) target = $region37
  $region36: #{mlp_critic_forward.1} parent=0 // pred_region
    _
  $region37: #{mlp_critic_forward.1} parent=0 // pred_fallthru
    _

</llo_original>
